<compile_context>
chip_gen: v5e
topology: v5e:2x2
jax: 0.10.0
libtpu: 0.0.40
codegen_flags: <defaults>
</compile_context>

<pallas_src>
import jax
import jax.numpy as jnp
from jax import lax
from jax.experimental import pallas as pl
from jax.experimental.pallas import tpu as pltpu


# ---------------------------------------------------------------------------
# Kernels
# ---------------------------------------------------------------------------

def _proj_norm_kernel(log_scale_ref, x_ref, w_ref, out_ref):
    """Project a row tile with a PyTorch-layout weight, L2-normalize, scale."""
    # x: (TM, H), w: (P, H)  ->  emb: (TM, P); contract last dims (x @ w.T).
    emb = lax.dot_general(
        x_ref[...], w_ref[...],
        dimension_numbers=(((1,), (1,)), ((), ())),
        preferred_element_type=jnp.float32)

    # L2 normalization along the embedding dim with an eps so that zero
    # (padded) rows produce 0 instead of NaN.  rsqrt goes to the EUP slot.
    norm_sq = jnp.sum(emb * emb, axis=-1, keepdims=True)
    inv_norm = lax.rsqrt(jnp.maximum(norm_sq, 1e-12))

    # exp(logit_scale) folded here (O(N*proj)); image path passes log_scale=0.
    scale = jnp.exp(log_scale_ref[0])
    out_ref[...] = (emb * (inv_norm * scale)).astype(out_ref.dtype)


def _similarity_kernel(txt_ref, img_ref, lt_ref, li_ref):
    """One (TT, TI) logits tile, written to both outputs (tile-local .T only)."""
    # txt: (TT, P), img: (TI, P) -> (TT, TI); f32 accumulation on the MXU.
    lt = lax.dot_general(
        txt_ref[...], img_ref[...],
        dimension_numbers=(((1,), (1,)), ((), ())),
        preferred_element_type=jnp.float32)
    lt_ref[...] = lt
    li_ref[...] = lt.T          # small tile-local transpose only


# ---------------------------------------------------------------------------
# Wrappers
# ---------------------------------------------------------------------------

def _round_up(x, m):
    return ((x + m - 1) // m) * m


def _pick_row_tile(n, target):
    """Return (tile, padded_rows): tile is (8-)aligned; padded_rows % tile == 0."""
    n8 = _round_up(max(n, 1), 8)
    if n8 <= target:
        return n8, n8
    return target, _round_up(n, target)


def _pad2d(x, rows, cols):
    r, c = x.shape
    if r == rows and c == cols:
        return x
    return jnp.pad(x, ((0, rows - r), (0, cols - c)))


def _project_normalize(log_scale, x, w, tile_rows, out_dtype):
    """Tiled projection + L2-normalize (+ optional folded logit scale)."""
    m_pad, h_pad = x.shape
    p_pad, _ = w.shape
    grid = (m_pad // tile_rows,)
    flops = 2 * m_pad * h_pad * p_pad + 3 * m_pad * p_pad
    bytes_accessed = (x.size * x.dtype.itemsize + w.size * w.dtype.itemsize
                      + m_pad * p_pad * jnp.dtype(out_dtype).itemsize)
    return pl.pallas_call(
        _proj_norm_kernel,
        out_shape=jax.ShapeDtypeStruct((m_pad, p_pad), out_dtype),
        grid=grid,
        in_specs=[
            pl.BlockSpec(memory_space=pltpu.MemorySpace.SMEM),      # log_scale (1,)
            pl.BlockSpec((tile_rows, h_pad), lambda i: (i, 0)),     # pooled rows
            pl.BlockSpec((p_pad, h_pad), lambda i: (0, 0)),         # resident weight
        ],
        out_specs=pl.BlockSpec((tile_rows, p_pad), lambda i: (i, 0)),
        compiler_params=pltpu.CompilerParams(
            dimension_semantics=("parallel",)),
        cost_estimate=pl.CostEstimate(flops=int(flops),
                                      transcendentals=int(m_pad),
                                      bytes_accessed=int(bytes_accessed)),
    )(log_scale, x, w)


def _similarity(txt_emb, img_emb, tt, ti):
    """Tiled logits_per_text / logits_per_image (both written from one tile)."""
    nt_pad, p_pad = txt_emb.shape
    ni_pad, _ = img_emb.shape
    grid = (nt_pad // tt, ni_pad // ti)
    flops = 2 * nt_pad * ni_pad * p_pad
    bytes_accessed = (txt_emb.size * txt_emb.dtype.itemsize
                      + img_emb.size * img_emb.dtype.itemsize
                      + 2 * nt_pad * ni_pad * 4)
    return pl.pallas_call(
        _similarity_kernel,
        out_shape=(
            jax.ShapeDtypeStruct((nt_pad, ni_pad), jnp.float32),   # logits_per_text
            jax.ShapeDtypeStruct((ni_pad, nt_pad), jnp.float32),   # logits_per_image
        ),
        grid=grid,
        in_specs=[
            pl.BlockSpec((tt, p_pad), lambda i, j: (i, 0)),
            pl.BlockSpec((ti, p_pad), lambda i, j: (j, 0)),
        ],
        out_specs=(
            pl.BlockSpec((tt, ti), lambda i, j: (i, j)),
            pl.BlockSpec((ti, tt), lambda i, j: (j, i)),
        ),
        compiler_params=pltpu.CompilerParams(
            dimension_semantics=("parallel", "parallel")),
        cost_estimate=pl.CostEstimate(flops=int(flops), transcendentals=0,
                                      bytes_accessed=int(bytes_accessed)),
    )(txt_emb, img_emb)


def semclip_forward(img_pooled, txt_pooled, w_visual, w_text, logit_scale,
                    *, sim_dtype=jnp.bfloat16, row_tile=256):
    """Fused SemCLIP contrastive head.

    Args:
      img_pooled:  (N_img, vision_hidden) pooled vision-model outputs.
      txt_pooled:  (N_txt, text_hidden)   pooled text-model outputs.
      w_visual:    (proj_dim, vision_hidden) visual_projection weight (PyTorch layout).
      w_text:      (proj_dim, text_hidden)   text_projection weight (PyTorch layout).
      logit_scale: scalar or (1,) log-scale parameter (exp'd inside the kernel).
      sim_dtype:   dtype of the stored normalized embeddings / similarity-matmul
                   operands (bf16 by default; f32 accumulation either way).
      row_tile:    batch-row tile size (multiple of 128 recommended).

    Returns:
      (logits_per_image (N_img, N_txt), logits_per_text (N_txt, N_img)), f32.
    """
    n_img, h_v = img_pooled.shape
    n_txt, h_t = txt_pooled.shape
    p_v = w_visual.shape[0]
    p_t = w_text.shape[0]
    assert p_v == p_t, "visual and text projections must share projection_dim"
    assert w_visual.shape[1] == h_v and w_text.shape[1] == h_t

    # Lane-axis padding to 128, row padding to the chosen tile.
    hv_pad = _round_up(h_v, 128)
    ht_pad = _round_up(h_t, 128)
    p_pad = _round_up(p_v, 128)
    ti, ni_pad = _pick_row_tile(n_img, row_tile)
    tt, nt_pad = _pick_row_tile(n_txt, row_tile)

    img_p = _pad2d(jnp.asarray(img_pooled), ni_pad, hv_pad)
    txt_p = _pad2d(jnp.asarray(txt_pooled), nt_pad, ht_pad)
    wv_p = _pad2d(jnp.asarray(w_visual), p_pad, hv_pad)
    wt_p = _pad2d(jnp.asarray(w_text), p_pad, ht_pad)

    log_scale = jnp.asarray(logit_scale, jnp.float32).reshape(1)
    zero_scale = jnp.zeros((1,), jnp.float32)     # exp(0) = 1 for the image path

    # Stage 1: project + normalize once per side (not per (i, j) grid point).
    img_emb = _project_normalize(zero_scale, img_p, wv_p, ti, sim_dtype)
    txt_emb = _project_normalize(log_scale, txt_p, wt_p, tt, sim_dtype)

    # Stage 2: tiled scaled cosine-similarity logits (both orientations).
    lt_pad, li_pad = _similarity(txt_emb, img_emb, tt, ti)

    logits_per_text = lt_pad[:n_txt, :n_img]
    logits_per_image = li_pad[:n_img, :n_txt]
    return logits_per_image, logits_per_text


# ---------------------------------------------------------------------------
# Reference + test
# ---------------------------------------------------------------------------

def _reference(img_pooled, txt_pooled, w_visual, w_text, logit_scale):
    img_emb = img_pooled @ w_visual.T
    txt_emb = txt_pooled @ w_text.T
    img_emb = img_emb / jnp.linalg.norm(img_emb, axis=-1, keepdims=True)
    txt_emb = txt_emb / jnp.linalg.norm(txt_emb, axis=-1, keepdims=True)
    logits_per_text = (txt_emb @ img_emb.T) * jnp.exp(logit_scale)
    return logits_per_text.T, logits_per_text


if __name__ == "__main__":
    key = jax.random.PRNGKey(0)
    k_img, k_txt, k_wv, k_wt, k2_img, k2_txt, k2_wv, k2_wt = jax.random.split(key, 8)

    # ---- Test A: small CLIP-like shapes (exercises padding / full-dim tiles) ----
    n_img, n_txt = 2, 2
    vision_hidden, text_hidden, proj_dim = 48, 32, 16

    img_pooled = jax.random.normal(k_img, (n_img, vision_hidden), jnp.float32)
    txt_pooled = jax.random.normal(k_txt, (n_txt, text_hidden), jnp.float32)
    # nn.Linear weight layout: (out_features, in_features), bias=False in CLIP projections.
    w_visual = 0.02 * jax.random.normal(k_wv, (proj_dim, vision_hidden), jnp.float32)
    w_text = 0.02 * jax.random.normal(k_wt, (proj_dim, text_hidden), jnp.float32)
    # CLIP's logit_scale init: log(1/0.07)
    logit_scale = jnp.array([jnp.log(1.0 / 0.07)], jnp.float32)

    ref_li, ref_lt = _reference(img_pooled, txt_pooled, w_visual, w_text, logit_scale[0])

    li_f32, lt_f32 = semclip_forward(img_pooled, txt_pooled, w_visual, w_text,
                                     logit_scale, sim_dtype=jnp.float32)
    li_bf16, lt_bf16 = semclip_forward(img_pooled, txt_pooled, w_visual, w_text,
                                       logit_scale, sim_dtype=jnp.bfloat16)
    jax.block_until_ready((li_f32, lt_f32, li_bf16, lt_bf16))

    assert li_f32.shape == (n_img, n_txt) and lt_f32.shape == (n_txt, n_img)
    assert jnp.allclose(li_f32, ref_li, atol=5e-3, rtol=5e-3)
    assert jnp.allclose(lt_f32, ref_lt, atol=5e-3, rtol=5e-3)
    assert jnp.allclose(li_bf16, ref_li, atol=1.5e-1, rtol=3e-2)
    assert jnp.allclose(lt_bf16, ref_lt, atol=1.5e-1, rtol=3e-2)

    # ---- Test B: larger CLIP-base-like shapes (exercises a real multi-tile grid) ----
    n_img_b, n_txt_b = 384, 320
    vh_b, th_b, pd_b = 768, 512, 512
    img_b = jax.random.normal(k2_img, (n_img_b, vh_b), jnp.float32)
    txt_b = jax.random.normal(k2_txt, (n_txt_b, th_b), jnp.float32)
    wv_b = 0.02 * jax.random.normal(k2_wv, (pd_b, vh_b), jnp.float32)
    wt_b = 0.02 * jax.random.normal(k2_wt, (pd_b, th_b), jnp.float32)

    ref_li_b, ref_lt_b = _reference(img_b, txt_b, wv_b, wt_b, logit_scale[0])
    li_b, lt_b = semclip_forward(img_b, txt_b, wv_b, wt_b, logit_scale,
                                 sim_dtype=jnp.float32)
    jax.block_until_ready((li_b, lt_b))

    assert li_b.shape == (n_img_b, n_txt_b) and lt_b.shape == (n_txt_b, n_img_b)
    assert jnp.allclose(li_b, ref_li_b, atol=5e-2, rtol=1e-2)
    assert jnp.allclose(lt_b, ref_lt_b, atol=5e-2, rtol=1e-2)

    print("KERNEL_OK")
</pallas_src>

<mosaic_0001>
module attributes {stable_mosaic.version = 11 : i64} {
  func.func @_proj_norm_kernel(%arg0: i32, %arg1: memref<1xf32, #tpu.memory_space<smem>>, %arg2: memref<8x128xf32, #tpu.memory_space<vmem>>, %arg3: memref<128x128xf32, #tpu.memory_space<vmem>>, %arg4: memref<8x128xf32, #tpu.memory_space<vmem>>) attributes {dimension_semantics = [#tpu.dimension_semantics<parallel>], iteration_bounds = array<i64: 1>, scalar_prefetch = 0 : i64, scratch_operands = 0 : i64, tpu.core_type = #tpu.core_type<tc>, window_params = [{transform_indices = @transform_0, window_bounds = array<i64: 1>}, {transform_indices = @transform_1, window_bounds = array<i64: 8, 128>}, {pipeline_mode = #tpu.pipeline_mode<synchronous>, transform_indices = @transform_2, window_bounds = array<i64: 128, 128>}, {transform_indices = @transform_3, window_bounds = array<i64: 8, 128>}]} {
    %c0 = arith.constant 0 : index
    %c0_0 = arith.constant 0 : index
    %0 = vector.load %arg2[%c0, %c0_0] : memref<8x128xf32, #tpu.memory_space<vmem>>, vector<8x128xf32>
    %c0_1 = arith.constant 0 : index
    %c0_2 = arith.constant 0 : index
    %1 = vector.load %arg3[%c0_1, %c0_2] : memref<128x128xf32, #tpu.memory_space<vmem>>, vector<128x128xf32>
    %cst = arith.constant dense<0.000000e+00> : vector<8x128xf32>
    %2 = tpu.matmul %0, %1, %cst {dimension_numbers = #tpu.dot_dimension_numbers<[1], [1], [0], [0], [0, 0, 1, 0], [], []>} : vector<8x128xf32>, vector<128x128xf32>, vector<8x128xf32> -> vector<8x128xf32>
    %3 = arith.mulf %2, %2 : vector<8x128xf32>
    %cst_3 = arith.constant dense<0.000000e+00> : vector<8xf32>
    %4 = vector.multi_reduction <add>, %3, %cst_3 [1] : vector<8x128xf32> to vector<8xf32>
    %5 = vector.shape_cast %4 : vector<8xf32> to vector<8x1xf32>
    %cst_4 = arith.constant 9.99999996E-13 : f32
    %6 = vector.broadcast %cst_4 : f32 to vector<8x1xf32>
    %7 = arith.maximumf %5, %6 : vector<8x1xf32>
    %8 = math.rsqrt %7 : vector<8x1xf32>
    %c0_5 = arith.constant 0 : index
    %9 = memref.load %arg1[%c0_5] : memref<1xf32, #tpu.memory_space<smem>>
    %10 = math.exp %9 : f32
    %11 = vector.broadcast %10 : f32 to vector<8x1xf32>
    %12 = arith.mulf %8, %11 : vector<8x1xf32>
    %13 = vector.broadcast %12 : vector<8x1xf32> to vector<8x128xf32>
    %14 = arith.mulf %2, %13 : vector<8x128xf32>
    %c0_6 = arith.constant 0 : index
    %c0_7 = arith.constant 0 : index
    %15 = vector.load %arg4[%c0_6, %c0_7] : memref<8x128xf32, #tpu.memory_space<vmem>>, vector<8x128xf32>
    tpu.vector_store %arg4[%c0_6, %c0_7], %14 {strides = array<i32>} : memref<8x128xf32, #tpu.memory_space<vmem>>, vector<8x128xf32>,
    return
  }
  func.func @transform_0(%arg0: i32) -> i32 {
    %c0_i32 = arith.constant 0 : i32
    %c0_i32_0 = arith.constant 0 : i32
    return %c0_i32 : i32
  }
  func.func @transform_1(%arg0: i32) -> (i32, i32) {
    %c0_i32 = arith.constant 0 : i32
    %c0_i32_0 = arith.constant 0 : i32
    return %arg0, %c0_i32 : i32, i32
  }
  func.func @transform_2(%arg0: i32) -> (i32, i32) {
    %c0_i32 = arith.constant 0 : i32
    %c0_i32_0 = arith.constant 0 : i32
    %c0_i32_1 = arith.constant 0 : i32
    return %c0_i32, %c0_i32_0 : i32, i32
  }
  func.func @transform_3(%arg0: i32) -> (i32, i32) {
    %c0_i32 = arith.constant 0 : i32
    %c0_i32_0 = arith.constant 0 : i32
    return %arg0, %c0_i32 : i32, i32
  }
}

</mosaic_0001>

<llo_original>
// kernel: tpu_custom_call.1
$region0: #{tpu_custom_call.1}
  #allocation0 [shape = 'u32[]', space=smem, size = 0x4, offset = 0x4, fixed_abs, tag = 'smem constant byte address 0x4 - core index']
  #allocation1 [shape = 'u32[72,128]{1,0:T(1,128)}', space=vmem, size = 0x9000, scoped, tag = 'internal scratch']
  #allocation2 [shape = 'f32[1]{0:T(128)S(6)}', space=smem, size = 0x200, scoped, tag = 'scoped memory for tpu_custom_call.1']
  %s0 = inlined_call_operand.<no memory space> [shape: f32[1], index: 0, kind: input, shape index: {}]
  %s1 = inlined_call_operand.hbm [shape: f32[8,128], index: 1, kind: input, shape index: {}]
  %s2 = inlined_call_operand.hbm [shape: f32[128,128], index: 2, kind: input, shape index: {}]
  %s3 = inlined_call_operand.hbm [shape: f32[8,128], index: 3, kind: output, shape index: {}]
  %s4 = sld [smem:[#allocation0]]
  $region30: #{tpu_custom_call.1} parent=0
    _
  %s6 = ssub.s32 1, %s4
  %s7 = scalar_select 0, %s6, %s4
  %8 = sst [smem:[#allocation2]] %s0
  $region1: #{tpu_custom_call.1} parent=0
    #allocation3 [shape = 'u8[4096]{0}', space=vmem, size = 0x1000, scoped, tag = 'input window, operand 1, single buffered']
    #allocation4 [shape = 's32[1]{0}', space=sflag, size = 0x4, scoped, tag = 'scoped memory for tpu_custom_call.1']
    #allocation5 [shape = 's32[1]{0}', space=sflag, size = 0x4, scoped, tag = 'scoped memory for tpu_custom_call.1']
    #allocation6 [shape = 'u8[65536]{0}', space=vmem, size = 0x10000, scoped, tag = 'input window, operand 2, single buffered']
    #allocation7 [shape = 's32[1]{0}', space=sflag, size = 0x4, scoped, tag = 'scoped memory for tpu_custom_call.1']
    #allocation8 [shape = 'u8[4096]{0}', space=vmem, size = 0x1000, scoped, tag = 'output window, operand 0, single buffered']
    %9 = vsyncpa [#allocation4], 0
    %10 = vsyncpa [#allocation7], 0
    %11 = vsyncpa [#allocation5], 0
    // Predicated region
    $region2: #{tpu_custom_call.1} parent=1 // pred_check
      _
    $region3: #{tpu_custom_call.1} parent=1 // pred_check_branch
      %13 = sbr.rel (0) target = $region5
    $region4: #{tpu_custom_call.1} parent=1 // pred_region
      _
    $region5: #{tpu_custom_call.1} parent=1 // pred_fallthru
      _
    // Predicated region
    $region6: #{tpu_custom_call.1} parent=1 // pred_check
      _
    $region7: #{tpu_custom_call.1} parent=1 // pred_check_branch
      %15 = sbr.rel (0) target = $region9
    $region8: #{tpu_custom_call.1} parent=1 // pred_region
      %17 = vsyncadd [#allocation4], 0
      %s19 = sshll.u32 %s1, 4
      %s20 = int_to_ptr.hbm [resolvable:$true] %s19
      %s21 = sshll.u32 [#allocation3], 4
      %s22 = int_to_ptr.vmem [resolvable:$true] %s21
      %24 = dma.hbm_to_vmem [thread:$0]  %s20, 128, %s22, [#allocation4]
    $region9: #{tpu_custom_call.1} parent=1 // pred_fallthru
      _
    // Predicated region
    $region10: #{tpu_custom_call.1} parent=1 // pred_check
      _
    $region11: #{tpu_custom_call.1} parent=1 // pred_check_branch
      %26 = sbr.rel (0) target = $region13
    $region12: #{tpu_custom_call.1} parent=1 // pred_region
      %28 = vsyncadd [#allocation7], 0
      %s29 = sshll.u32 %s2, 4
      %s30 = int_to_ptr.hbm [resolvable:$true] %s29
      %s31 = sshll.u32 [#allocation6], 4
      %s32 = int_to_ptr.vmem [resolvable:$true] %s31
      %37 = dma.hbm_to_vmem [thread:$0]  %s30, 2048, %s32, [#allocation7], 128, 128, 8
    $region13: #{tpu_custom_call.1} parent=1 // pred_fallthru
      _
    // Predicated region
    $region14: #{tpu_custom_call.1} parent=1 // pred_check
      _
    $region15: #{tpu_custom_call.1} parent=1 // pred_check_branch
      %39 = sbr.rel (0) target = $region17
    $region16: #{tpu_custom_call.1} parent=1 // pred_region
      %41 = dma.done [#allocation4], 128
    $region17: #{tpu_custom_call.1} parent=1 // pred_fallthru
      _
    // Predicated region
    $region18: #{tpu_custom_call.1} parent=1 // pred_check
      _
    $region19: #{tpu_custom_call.1} parent=1 // pred_check_branch
      %43 = sbr.rel (0) target = $region21
    $region20: #{tpu_custom_call.1} parent=1 // pred_region
      %45 = dma.done [#allocation7], 2048
    $region21: #{tpu_custom_call.1} parent=1 // pred_fallthru
      _
    %v46 = vld [vmem:[#allocation3] sm:$0xff]
    %v47 = vld [vmem:[#allocation6] sm:$0xff]
    %v48 = vld [vmem:[#allocation6 + $0x8] sm:$0xff]
    %v49 = vld [vmem:[#allocation6 + $0x10] sm:$0xff]
    %v50 = vld [vmem:[#allocation6 + $0x18] sm:$0xff]
    %v51 = vld [vmem:[#allocation6 + $0x20] sm:$0xff]
    %v52 = vld [vmem:[#allocation6 + $0x28] sm:$0xff]
    %v53 = vld [vmem:[#allocation6 + $0x30] sm:$0xff]
    %v54 = vld [vmem:[#allocation6 + $0x38] sm:$0xff]
    %v55 = vld [vmem:[#allocation6 + $0x40] sm:$0xff]
    %v56 = vld [vmem:[#allocation6 + $0x48] sm:$0xff]
    %v57 = vld [vmem:[#allocation6 + $0x50] sm:$0xff]
    %v58 = vld [vmem:[#allocation6 + $0x58] sm:$0xff]
    %v59 = vld [vmem:[#allocation6 + $0x60] sm:$0xff]
    %v60 = vld [vmem:[#allocation6 + $0x68] sm:$0xff]
    %v61 = vld [vmem:[#allocation6 + $0x70] sm:$0xff]
    %v62 = vld [vmem:[#allocation6 + $0x78] sm:$0xff]
    %63 = vmatpush.xpose.msra.mxu0 %v62
    %64 = vmatpush.xpose.msra.mxu0 %v61
    %65 = vmatpush.xpose.msra.mxu0 %v60
    %66 = vmatpush.xpose.msra.mxu0 %v59
    %67 = vmatpush.xpose.msra.mxu0 %v58
    %68 = vmatpush.xpose.msra.mxu0 %v57
    %69 = vmatpush.xpose.msra.mxu0 %v56
    %70 = vmatpush.xpose.msra.mxu0 %v55
    %71 = vmatpush.xpose.msra.mxu0 %v54
    %72 = vmatpush.xpose.msra.mxu0 %v53
    %73 = vmatpush.xpose.msra.mxu0 %v52
    %74 = vmatpush.xpose.msra.mxu0 %v51
    %75 = vmatpush.xpose.msra.mxu0 %v50
    %76 = vmatpush.xpose.msra.mxu0 %v49
    %77 = vmatpush.xpose.msra.mxu0 %v48
    %78 = vmatpush.xpose.msra.mxu0 %v47
    %79 = vmatmul.f32.gmra.mxu0 %v46
    %v80 = vpop.f32.mrf.mxu0
    %v81 = vadd.f32 0.0, %v80
    %82 = vdwg.mxu0
    %v83 = vmul.f32 %v81, %v81
    %84 = vadd.xlane.f32.xlu0 %v83
    %v85 = vpop.xlane.xlu0 %84
    %v86 = vmax.f32 %v85, 1e-12
    %v87 = vrsqrt.pop %v86
    %v88 = vmul.f32 %v87, %v86
    %v89 = vmul.f32 %v88, %v87
    %v90 = vmul.f32 0.5, %v89
    %v91 = vsub.f32 1.5, %v90
    %v92 = vmul.f32 %v87, %v91
    %vm93 = vweird.f32 %v86
    %vm94 = vweird.f32 %v87
    %vm95 = vmor %vm93, %vm94
    %v96 = vsel %vm95, %v87, %v92
    %s97 = sld [smem:[#allocation2]]
    %v98 = vstv %s97
    %v99 = vmul.f32 %v98, 1.442695
    %v100 = vpow.pop %v99
    %s101 = vtos %v100
    %v102 = vstv %s101
    %v103 = vmul.f32 %v96, %v102
    %v104 = vmul.f32 %v81, %v103
    %105 = vst [vmem:[#allocation8] sm:$0xff] %v104
    // Predicated region
    $region22: #{tpu_custom_call.1} parent=1 // pred_check
      _
    $region23: #{tpu_custom_call.1} parent=1 // pred_check_branch
      %107 = sbr.rel (0) target = $region25
    $region24: #{tpu_custom_call.1} parent=1 // pred_region
      %109 = vsyncadd [#allocation5], 0
      %s111 = sshll.u32 [#allocation8], 4
      %s112 = int_to_ptr.vmem [resolvable:$true] %s111
      %s113 = sshll.u32 %s3, 4
      %s114 = int_to_ptr.hbm [resolvable:$true] %s113
      %116 = dma.vmem_to_hbm [thread:$0]  %s112, 128, %s114, [#allocation5]
    $region25: #{tpu_custom_call.1} parent=1 // pred_fallthru
      _
    // Predicated region
    $region26: #{tpu_custom_call.1} parent=1 // pred_check
      _
    $region27: #{tpu_custom_call.1} parent=1 // pred_check_branch
      %118 = sbr.rel (0) target = $region29
    $region28: #{tpu_custom_call.1} parent=1 // pred_region
      %120 = dma.done [#allocation5], 128
    $region29: #{tpu_custom_call.1} parent=1 // pred_fallthru
      _
    %121 = vsyncpa [#allocation4], 1
    %122 = vsyncpa [#allocation7], 1
    %123 = vsyncpa [#allocation5], 1

</llo_original>
